<compile_context>
chip_gen: v5e
topology: v5e:2x2
jax: 0.10.0
libtpu: 0.0.40
codegen_flags: <defaults>
</compile_context>

<pallas_src>
import functools

import jax
import jax.numpy as jnp
from jax.experimental import pallas as pl
from jax.experimental.pallas import tpu as pltpu

BN_EPS = 1e-5


def _round_up(x, m):
    return (x + m - 1) // m * m


# ---------------------------------------------------------------------------
# Kernel A: conv-as-matmul tile + per-tile partial BN statistics.
# ---------------------------------------------------------------------------
def conv_stats_kernel(p_ref, w_ref, conv_ref, stats_ref):
    # p_ref: (block_m, Kp) bf16 im2col tile, w_ref: (Kp, Cp) bf16.
    acc = jnp.dot(p_ref[...], w_ref[...], preferred_element_type=jnp.float32)  # (bm, Cp) f32
    conv_ref[...] = acc
    # Single-pass statistics: per-channel sum and sum-of-squares for this M tile.
    s1 = jnp.sum(acc, axis=0, keepdims=True)           # (1, Cp)
    s2 = jnp.sum(acc * acc, axis=0, keepdims=True)     # (1, Cp)
    pad = jnp.zeros((6, acc.shape[1]), jnp.float32)    # fill the sublane-aligned 8-row block
    stats_ref[...] = jnp.concatenate([s1, s2, pad], axis=0)


# ---------------------------------------------------------------------------
# Kernel B: BN affine (pre-folded per-channel scale/shift) + ReLU.
# ---------------------------------------------------------------------------
def bn_relu_kernel(conv_ref, scale_ref, shift_ref, o_ref):
    o_ref[...] = jnp.maximum(conv_ref[...] * scale_ref[...] + shift_ref[...], 0.0)


def _im2col_nhwc(x_nhwc, kh, kw, stride, padding):
    N, H, W, C = x_nhwc.shape
    xp = jnp.pad(x_nhwc, ((0, 0), (padding, padding), (padding, padding), (0, 0)))
    OH = (H + 2 * padding - kh) // stride + 1
    OW = (W + 2 * padding - kw) // stride + 1
    cols = []
    for i in range(kh):            # (kh, kw, cin) order matches weight flattening below
        for j in range(kw):
            cols.append(xp[:, i:i + stride * OH:stride, j:j + stride * OW:stride, :])
    patches = jnp.concatenate(cols, axis=-1)            # (N, OH, OW, KH*KW*C)
    return patches.reshape(N * OH * OW, kh * kw * C), OH, OW


def conv_block(x_nchw, weight, bias, gamma, beta, stride, padding, *, block_m=256):
    """x_nchw: (N, Cin, H, W); weight: (Cout, Cin, KH, KW) like nn.Conv2d."""
    # Conv bias cancels exactly under training-mode BatchNorm (mean-subtracted, var unchanged).
    del bias
    N, Cin, H, W = x_nchw.shape
    Cout, _, KH, KW = weight.shape

    # TODO(synk): im2col is still materialized in HBM by the wrapper (KH*KW x activation
    # blow-up); an implicit in-kernel im2col with halo DMAs would cut that traffic further.
    x_nhwc = jnp.transpose(x_nchw, (0, 2, 3, 1)).astype(jnp.float32)
    patches, OH, OW = _im2col_nhwc(x_nhwc, KH, KW, stride, padding)   # (M, K)
    M, K = patches.shape

    # Lane/sublane-dense padding: K and Cout to multiples of 128, M to a multiple of block_m.
    Kp = _round_up(K, 128)
    Cp = _round_up(Cout, 128)
    Mp = _round_up(M, block_m)
    m_tiles = Mp // block_m

    # Zero-padded rows/cols contribute exactly 0 to the matmul, the sums and the sums of
    # squares (no bias added inside the kernel), so BN stats stay exact for the true M rows.
    patches_p = jnp.pad(patches, ((0, Mp - M), (0, Kp - K))).astype(jnp.bfloat16)

    # (Cout, Cin, KH, KW) -> (KH, KW, Cin, Cout) -> (K, Cout) -> zero-pad -> (Kp, Cp)
    w_mat = jnp.transpose(weight, (2, 3, 1, 0)).reshape(K, Cout).astype(jnp.float32)
    w_p = jnp.pad(w_mat, ((0, Kp - K), (0, Cp - Cout))).astype(jnp.bfloat16)

    # Padded channels get gamma = beta = 0 -> exact zeros out (never rsqrt(eps) garbage).
    gamma_p = jnp.pad(gamma.astype(jnp.float32), (0, Cp - Cout))
    beta_p = jnp.pad(beta.astype(jnp.float32), (0, Cp - Cout))

    cost_a = pl.CostEstimate(
        flops=2 * Mp * Kp * Cp + 4 * Mp * Cp,
        transcendentals=0,
        bytes_accessed=patches_p.size * 2 + w_p.size * 2 + Mp * Cp * 4 + m_tiles * 8 * Cp * 4,
    )
    conv_out, part_stats = pl.pallas_call(
        conv_stats_kernel,
        out_shape=(
            jax.ShapeDtypeStruct((Mp, Cp), jnp.float32),
            jax.ShapeDtypeStruct((m_tiles * 8, Cp), jnp.float32),
        ),
        grid_spec=pltpu.PrefetchScalarGridSpec(
            num_scalar_prefetch=0,
            grid=(m_tiles,),
            in_specs=[
                pl.BlockSpec((block_m, Kp), lambda i: (i, 0)),
                pl.BlockSpec((Kp, Cp), lambda i: (0, 0)),
            ],
            out_specs=(
                pl.BlockSpec((block_m, Cp), lambda i: (i, 0)),
                pl.BlockSpec((8, Cp), lambda i: (i, 0)),
            ),
        ),
        compiler_params=pltpu.CompilerParams(dimension_semantics=("parallel",)),
        cost_estimate=cost_a,
    )(patches_p, w_p)

    # Tiny 128-wide reduction + BN constant folding in plain JAX (negligible cost).
    part = part_stats.reshape(m_tiles, 8, Cp)
    ch_sum = jnp.sum(part[:, 0, :], axis=0)                 # (Cp,)
    ch_sumsq = jnp.sum(part[:, 1, :], axis=0)               # (Cp,)
    inv_m = 1.0 / M                                         # true M, not padded
    mean = ch_sum * inv_m
    var = jnp.maximum(ch_sumsq * inv_m - mean * mean, 0.0)  # biased variance (train mode)
    inv_std = jax.lax.rsqrt(var + BN_EPS)
    scale = (gamma_p * inv_std).reshape(1, Cp)
    shift = (beta_p - mean * gamma_p * inv_std).reshape(1, Cp)

    cost_b = pl.CostEstimate(
        flops=3 * Mp * Cp,
        transcendentals=0,
        bytes_accessed=2 * Mp * Cp * 4 + 2 * Cp * 4,
    )
    out_p = pl.pallas_call(
        bn_relu_kernel,
        out_shape=jax.ShapeDtypeStruct((Mp, Cp), jnp.float32),
        grid_spec=pltpu.PrefetchScalarGridSpec(
            num_scalar_prefetch=0,
            grid=(m_tiles,),
            in_specs=[
                pl.BlockSpec((block_m, Cp), lambda i: (i, 0)),
                pl.BlockSpec((1, Cp), lambda i: (0, 0)),
                pl.BlockSpec((1, Cp), lambda i: (0, 0)),
            ],
            out_specs=pl.BlockSpec((block_m, Cp), lambda i: (i, 0)),
        ),
        compiler_params=pltpu.CompilerParams(dimension_semantics=("parallel",)),
        cost_estimate=cost_b,
    )(conv_out, scale, shift)

    out_nhwc = out_p[:M, :Cout].reshape(N, OH, OW, Cout)
    return jnp.transpose(out_nhwc, (0, 3, 1, 2))            # back to NCHW


def _reference(x_nchw, weight, bias, gamma, beta, stride, padding):
    # Pure-JAX reference (f32, conv bias included, BatchNorm training-mode stats).
    N, Cin, H, W = x_nchw.shape
    Cout, _, KH, KW = weight.shape
    x_nhwc = jnp.transpose(x_nchw, (0, 2, 3, 1)).astype(jnp.float32)
    patches, OH, OW = _im2col_nhwc(x_nhwc, KH, KW, stride, padding)
    w_mat = jnp.transpose(weight, (2, 3, 1, 0)).reshape(patches.shape[1], Cout)
    acc = patches @ w_mat + bias.reshape(1, Cout)
    mean = acc.mean(axis=0, keepdims=True)
    var = ((acc - mean) ** 2).mean(axis=0, keepdims=True)
    y = (acc - mean) / jnp.sqrt(var + BN_EPS) * gamma.reshape(1, Cout) + beta.reshape(1, Cout)
    y = jnp.maximum(y, 0.0).reshape(N, OH, OW, Cout)
    return jnp.transpose(y, (0, 3, 1, 2))


if __name__ == "__main__":
    # ConvBlock(in_channels=4, out_channels=8, kernel_size=3, stride=1, padding=1, fourier=False)
    N, Cin, H, W = 2, 4, 16, 16
    Cout, Ksz, stride, padding = 8, 3, 1, 1

    key = jax.random.PRNGKey(0)
    kx, kw, kb, kg, kbeta = jax.random.split(key, 5)
    x = jax.random.normal(kx, (N, Cin, H, W), dtype=jnp.float32)
    weight = jax.random.normal(kw, (Cout, Cin, Ksz, Ksz), dtype=jnp.float32) * 0.1
    bias = jax.random.normal(kb, (Cout,), dtype=jnp.float32) * 0.1
    gamma = 1.0 + 0.1 * jax.random.normal(kg, (Cout,), dtype=jnp.float32)
    beta = 0.1 * jax.random.normal(kbeta, (Cout,), dtype=jnp.float32)

    conv_fn = jax.jit(functools.partial(conv_block, stride=stride, padding=padding))
    out = conv_fn(x, weight, bias, gamma, beta)
    out = jax.block_until_ready(out)

    ref = _reference(x, weight, bias, gamma, beta, stride, padding)
    assert out.shape == (N, Cout, H, W), out.shape
    assert jnp.allclose(out, ref, atol=2e-2, rtol=2e-2), float(jnp.max(jnp.abs(out - ref)))

    print("KERNEL_OK")
</pallas_src>

<mosaic_0001>
module attributes {stable_mosaic.version = 11 : i64} {
  func.func @conv_stats_kernel(%arg0: i32, %arg1: memref<256x128xbf16, #tpu.memory_space<vmem>>, %arg2: memref<128x128xbf16, #tpu.memory_space<vmem>>, %arg3: memref<256x128xf32, #tpu.memory_space<vmem>>, %arg4: memref<8x128xf32, #tpu.memory_space<vmem>>) attributes {dimension_semantics = [#tpu.dimension_semantics<parallel>], iteration_bounds = array<i64: 2>, scalar_prefetch = 0 : i64, scratch_operands = 0 : i64, tpu.core_type = #tpu.core_type<tc>, window_params = [{transform_indices = @transform_0, window_bounds = array<i64: 256, 128>}, {pipeline_mode = #tpu.pipeline_mode<synchronous>, transform_indices = @transform_1, window_bounds = array<i64: 128, 128>}, {transform_indices = @transform_2, window_bounds = array<i64: 256, 128>}, {transform_indices = @transform_3, window_bounds = array<i64: 8, 128>}]} {
    %c0 = arith.constant 0 : index
    %c0_0 = arith.constant 0 : index
    %0 = vector.load %arg1[%c0, %c0_0] : memref<256x128xbf16, #tpu.memory_space<vmem>>, vector<256x128xbf16>
    %c0_1 = arith.constant 0 : index
    %c0_2 = arith.constant 0 : index
    %1 = vector.load %arg2[%c0_1, %c0_2] : memref<128x128xbf16, #tpu.memory_space<vmem>>, vector<128x128xbf16>
    %cst = arith.constant dense<0.000000e+00> : vector<256x128xf32>
    %2 = tpu.matmul %0, %1, %cst {dimension_numbers = #tpu.dot_dimension_numbers<[1], [0], [0], [1], [0, 0, 1, 1], [], []>} : vector<256x128xbf16>, vector<128x128xbf16>, vector<256x128xf32> -> vector<256x128xf32>
    %c0_3 = arith.constant 0 : index
    %c0_4 = arith.constant 0 : index
    %3 = vector.load %arg3[%c0_3, %c0_4] : memref<256x128xf32, #tpu.memory_space<vmem>>, vector<256x128xf32>
    tpu.vector_store %arg3[%c0_3, %c0_4], %2 {strides = array<i32>} : memref<256x128xf32, #tpu.memory_space<vmem>>, vector<256x128xf32>,
    %cst_5 = arith.constant dense<0.000000e+00> : vector<128xf32>
    %4 = vector.multi_reduction <add>, %2, %cst_5 [0] : vector<256x128xf32> to vector<128xf32>
    %5 = vector.shape_cast %4 : vector<128xf32> to vector<1x128xf32>
    %6 = arith.mulf %2, %2 : vector<256x128xf32>
    %cst_6 = arith.constant dense<0.000000e+00> : vector<128xf32>
    %7 = vector.multi_reduction <add>, %6, %cst_6 [0] : vector<256x128xf32> to vector<128xf32>
    %8 = vector.shape_cast %7 : vector<128xf32> to vector<1x128xf32>
    %cst_7 = arith.constant 0.000000e+00 : f32
    %9 = vector.broadcast %cst_7 : f32 to vector<6x128xf32>
    %10 = tpu.concatenate %5, %8, %9 in 0 : vector<1x128xf32>, vector<1x128xf32>, vector<6x128xf32> -> vector<8x128xf32>
    %c0_8 = arith.constant 0 : index
    %c0_9 = arith.constant 0 : index
    %11 = vector.load %arg4[%c0_8, %c0_9] : memref<8x128xf32, #tpu.memory_space<vmem>>, vector<8x128xf32>
    tpu.vector_store %arg4[%c0_8, %c0_9], %10 {strides = array<i32>} : memref<8x128xf32, #tpu.memory_space<vmem>>, vector<8x128xf32>,
    return
  }
  func.func @transform_0(%arg0: i32) -> (i32, i32) {
    %c0_i32 = arith.constant 0 : i32
    %c0_i32_0 = arith.constant 0 : i32
    return %arg0, %c0_i32 : i32, i32
  }
  func.func @transform_1(%arg0: i32) -> (i32, i32) {
    %c0_i32 = arith.constant 0 : i32
    %c0_i32_0 = arith.constant 0 : i32
    %c0_i32_1 = arith.constant 0 : i32
    return %c0_i32, %c0_i32_0 : i32, i32
  }
  func.func @transform_2(%arg0: i32) -> (i32, i32) {
    %c0_i32 = arith.constant 0 : i32
    %c0_i32_0 = arith.constant 0 : i32
    return %arg0, %c0_i32 : i32, i32
  }
  func.func @transform_3(%arg0: i32) -> (i32, i32) {
    %c0_i32 = arith.constant 0 : i32
    %c0_i32_0 = arith.constant 0 : i32
    return %arg0, %c0_i32 : i32, i32
  }
}

module attributes {stable_mosaic.version = 11 : i64} {
  func.func @bn_relu_kernel(%arg0: i32, %arg1: memref<256x128xf32, #tpu.memory_space<vmem>>, %arg2: memref<1x128xf32, #tpu.memory_space<vmem>>, %arg3: memref<1x128xf32, #tpu.memory_space<vmem>>, %arg4: memref<256x128xf32, #tpu.memory_space<vmem>>) attributes {dimension_semantics = [#tpu.dimension_semantics<parallel>], iteration_bounds = array<i64: 2>, scalar_prefetch = 0 : i64, scratch_operands = 0 : i64, tpu.core_type = #tpu.core_type<tc>, window_params = [{transform_indices = @transform_0, window_bounds = array<i64: 256, 128>}, {pipeline_mode = #tpu.pipeline_mode<synchronous>, transform_indices = @transform_1, window_bounds = array<i64: 1, 128>}, {pipeline_mode = #tpu.pipeline_mode<synchronous>, transform_indices = @transform_2, window_bounds = array<i64: 1, 128>}, {transform_indices = @transform_3, window_bounds = array<i64: 256, 128>}]} {
    %c0 = arith.constant 0 : index
    %c0_0 = arith.constant 0 : index
    %0 = vector.load %arg1[%c0, %c0_0] : memref<256x128xf32, #tpu.memory_space<vmem>>, vector<256x128xf32>
    %c0_1 = arith.constant 0 : index
    %c0_2 = arith.constant 0 : index
    %1 = vector.load %arg2[%c0_1, %c0_2] : memref<1x128xf32, #tpu.memory_space<vmem>>, vector<1x128xf32>
    %2 = vector.broadcast %1 : vector<1x128xf32> to vector<256x128xf32>
    %3 = arith.mulf %0, %2 : vector<256x128xf32>
    %c0_3 = arith.constant 0 : index
    %c0_4 = arith.constant 0 : index
    %4 = vector.load %arg3[%c0_3, %c0_4] : memref<1x128xf32, #tpu.memory_space<vmem>>, vector<1x128xf32>
    %5 = vector.broadcast %4 : vector<1x128xf32> to vector<256x128xf32>
    %6 = arith.addf %3, %5 : vector<256x128xf32>
    %cst = arith.constant 0.000000e+00 : f32
    %7 = vector.broadcast %cst : f32 to vector<256x128xf32>
    %8 = arith.maximumf %6, %7 : vector<256x128xf32>
    %c0_5 = arith.constant 0 : index
    %c0_6 = arith.constant 0 : index
    %9 = vector.load %arg4[%c0_5, %c0_6] : memref<256x128xf32, #tpu.memory_space<vmem>>, vector<256x128xf32>
    tpu.vector_store %arg4[%c0_5, %c0_6], %8 {strides = array<i32>} : memref<256x128xf32, #tpu.memory_space<vmem>>, vector<256x128xf32>,
    return
  }
  func.func @transform_0(%arg0: i32) -> (i32, i32) {
    %c0_i32 = arith.constant 0 : i32
    %c0_i32_0 = arith.constant 0 : i32
    return %arg0, %c0_i32 : i32, i32
  }
  func.func @transform_1(%arg0: i32) -> (i32, i32) {
    %c0_i32 = arith.constant 0 : i32
    %c0_i32_0 = arith.constant 0 : i32
    %c0_i32_1 = arith.constant 0 : i32
    return %c0_i32, %c0_i32_0 : i32, i32
  }
  func.func @transform_2(%arg0: i32) -> (i32, i32) {
    %c0_i32 = arith.constant 0 : i32
    %c0_i32_0 = arith.constant 0 : i32
    %c0_i32_1 = arith.constant 0 : i32
    return %c0_i32, %c0_i32_0 : i32, i32
  }
  func.func @transform_3(%arg0: i32) -> (i32, i32) {
    %c0_i32 = arith.constant 0 : i32
    %c0_i32_0 = arith.constant 0 : i32
    return %arg0, %c0_i32 : i32, i32
  }
}

</mosaic_0001>

<llo_original>
// kernel: conv_block.3
$region0: #{conv_block.3}
  #allocation0 [shape = 'u32[]', space=smem, size = 0x4, offset = 0x4, fixed_abs, tag = 'smem constant byte address 0x4 - core index']
  #allocation1 [shape = 'u32[72,128]{1,0:T(1,128)}', space=vmem, size = 0x9000, scoped, tag = 'internal scratch']
  %s0 = inlined_call_operand.vmem [shape: f32[512,128], index: 0, kind: input, shape index: {}]
  %s1 = inlined_call_operand.vmem [shape: f32[1,128], index: 1, kind: input, shape index: {}]
  %s2 = inlined_call_operand.vmem [shape: f32[1,128], index: 2, kind: input, shape index: {}]
  %s3 = inlined_call_operand.vmem [shape: f32[512,128], index: 3, kind: output, shape index: {}]
  %s4 = sld [smem:[#allocation0]]
  $region45: #{conv_block.3} parent=0
    _
  %s6 = ssub.s32 1, %s4
  %s7 = scalar_select 0, %s6, %s4
  loop: start=0, step=1, limit=4
  $region2: #{conv_block.3} parent=0 // loop_pre_header
    _
  $region3: #{conv_block.3} parent=0 // loop_header
    %s9 = sphi 0, %s13
    %p10 = scmp.ge.s32.totalorder %s9, 4
    %s19 = sphi 0, %s21
    %s22 = sphi 0, %s19
    %s23 = sphi 0, %s22
    %s39 = sphi 0, %s23
    %s43 = sphi 0, %s43
    %s45 = sphi 0, %s43
    %s46 = sphi 0, %s45
    %s60 = sphi 0, %s46
    %s64 = sphi 0, %s64
    %s66 = sphi 0, %s64
    %s67 = sphi 0, %s66
    %s81 = sphi 0, %s67
    %s87 = sphi 0, %s89
    %s90 = sphi 0, %s87
    %s91 = sphi 0, %s90
    %s107 = sphi 0, %s91
  $region4: #{conv_block.3} parent=0 // loop_header_branch
    %12 = sbr.rel (%p10) target = $region8
  $region5: #{conv_block.3} parent=0 // loop_body
    %s14 = ssub.s32 %s9, 1
    %s15 = ssub.s32 %s9, 2
    %s16 = sadd.s32 %s9, 1
    %s17 = ssub.s32 %s9, %s16
    %p18 = scmp.eq.s32.totalorder %s17, 0
    %s20 = sadd.s32 %s19, 1
    %s21 = scalar_select %p18, %s19, %s20
    %p24 = pneg %p18
    %p25 = scmp.eq.s32.totalorder %s9, 1
    %p26 = por %p24, %p25
    %p27 = scmp.ne.s32.totalorder %s19, %s22
    %p28 = scmp.eq.s32.totalorder %s9, 0
    %p29 = por %p27, %p28
    %p30 = scmp.ne.s32.totalorder %s19, %s22
    %p31 = scmp.eq.s32.totalorder %s14, 1
    %p32 = por %p30, %p31
    %p33 = scmp.ne.s32.totalorder %s22, %s23
    %p34 = scmp.eq.s32.totalorder %s14, 0
    %p35 = por %p33, %p34
    %p36 = scmp.ne.s32.totalorder %s22, %s23
    %p37 = scmp.eq.s32.totalorder %s15, 1
    %p38 = por %p36, %p37
    %p40 = scmp.ne.s32.totalorder %s23, %s39
    %p41 = scmp.eq.s32.totalorder %s15, 0
    %p42 = por %p40, %p41
    %s44 = sadd.s32 %s43, 1
    %p47 = scmp.eq.s32.totalorder %s9, 1
    %p48 = scmp.ne.s32.totalorder %s43, %s45
    %p49 = scmp.eq.s32.totalorder %s9, 0
    %p50 = por %p48, %p49
    %p51 = scmp.ne.s32.totalorder %s43, %s45
    %p52 = scmp.eq.s32.totalorder %s14, 1
    %p53 = por %p51, %p52
    %p54 = scmp.ne.s32.totalorder %s45, %s46
    %p55 = scmp.eq.s32.totalorder %s14, 0
    %p56 = por %p54, %p55
    %p57 = scmp.ne.s32.totalorder %s45, %s46
    %p58 = scmp.eq.s32.totalorder %s15, 1
    %p59 = por %p57, %p58
    %p61 = scmp.ne.s32.totalorder %s46, %s60
    %p62 = scmp.eq.s32.totalorder %s15, 0
    %p63 = por %p61, %p62
    %s65 = sadd.s32 %s64, 1
    %p68 = scmp.eq.s32.totalorder %s9, 1
    %p69 = scmp.ne.s32.totalorder %s64, %s66
    %p70 = scmp.eq.s32.totalorder %s9, 0
    %p71 = por %p69, %p70
    %p72 = scmp.ne.s32.totalorder %s64, %s66
    %p73 = scmp.eq.s32.totalorder %s14, 1
    %p74 = por %p72, %p73
    %p75 = scmp.ne.s32.totalorder %s66, %s67
    %p76 = scmp.eq.s32.totalorder %s14, 0
    %p77 = por %p75, %p76
    %p78 = scmp.ne.s32.totalorder %s66, %s67
    %p79 = scmp.eq.s32.totalorder %s15, 1
    %p80 = por %p78, %p79
    %p82 = scmp.ne.s32.totalorder %s67, %s81
    %p83 = scmp.eq.s32.totalorder %s15, 0
    %p84 = por %p82, %p83
    %s85 = ssub.s32 %s9, %s16
    %p86 = scmp.eq.s32.totalorder %s85, 0
    %s88 = sadd.s32 %s87, 1
    %s89 = scalar_select %p86, %s87, %s88
    %p92 = pneg %p86
    %p93 = scmp.eq.s32.totalorder %s9, 1
    %p94 = por %p92, %p93
    %p95 = scmp.ne.s32.totalorder %s87, %s90
    %p96 = scmp.eq.s32.totalorder %s9, 0
    %p97 = por %p95, %p96
    %p98 = scmp.ne.s32.totalorder %s87, %s90
    %p99 = scmp.eq.s32.totalorder %s14, 1
    %p100 = por %p98, %p99
    %p101 = scmp.ne.s32.totalorder %s90, %s91
    %p102 = scmp.eq.s32.totalorder %s14, 0
    %p103 = por %p101, %p102
    %p104 = scmp.ne.s32.totalorder %s90, %s91
    %p105 = scmp.eq.s32.totalorder %s15, 1
    %p106 = por %p104, %p105
    %p108 = scmp.ne.s32.totalorder %s91, %s107
    %p109 = scmp.eq.s32.totalorder %s15, 0
    %p110 = por %p108, %p109
    %p111 = scmp.le.s32.totalorder 1, %s9
    %p112 = scmp.lt.s32.totalorder %s9, 3
    %p113 = pnand %p111, %p112
    %p114 = pneg %p113
    // Predicated region
    $region9: #{conv_block.3} parent=5 // pred_check
      _
    $region10: #{conv_block.3} parent=5 // pred_check_branch
      %116 = sbr.rel (%p113) target = $region12
    $region11: #{conv_block.3} parent=5 // pred_region
      %s117 = ssub.s32 %s9, 1
      // Predicated region
      $region13: #{conv_block.3} parent=11 // pred_check
        %p118 = pneg %p56
      $region14: #{conv_block.3} parent=11 // pred_check_branch
        %120 = sbr.rel (%p118) target = $region16
      $region15: #{conv_block.3} parent=11 // pred_region
        _
      $region16: #{conv_block.3} parent=11 // pred_fallthru
        _
      // Predicated region
      $region17: #{conv_block.3} parent=11 // pred_check
        %p121 = pneg %p77
      $region18: #{conv_block.3} parent=11 // pred_check_branch
        %123 = sbr.rel (%p121) target = $region20
      $region19: #{conv_block.3} parent=11 // pred_region
        _
      $region20: #{conv_block.3} parent=11 // pred_fallthru
        _
    $region12: #{conv_block.3} parent=5 // pred_fallthru
      _
    %p124 = scmp.lt.s32.totalorder %s9, 2
    // Predicated region
    $region21: #{conv_block.3} parent=5 // pred_check
      %p125 = pneg %p124
    $region22: #{conv_block.3} parent=5 // pred_check_branch
      %127 = sbr.rel (%p125) target = $region24
    $region23: #{conv_block.3} parent=5 // pred_region
      // Predicated region
      $region25: #{conv_block.3} parent=23 // pred_check
        %p128 = pneg %p29
      $region26: #{conv_block.3} parent=23 // pred_check_branch
        %130 = sbr.rel (%p128) target = $region28
      $region27: #{conv_block.3} parent=23 // pred_region
        %s131 = smul.u32 32, %s9
        %p132 = scmp.lt.s32.totalorder %s131, 63
        %s133 = scalar_select %p132, %s131, 63
        %s134 = smul.addr %s133, 8
        %s135 = scalar_lea.vmem %s0, %s134
        %s136 = smul.u32 32, %s9
      $region28: #{conv_block.3} parent=23 // pred_fallthru
        _
    $region24: #{conv_block.3} parent=5 // pred_fallthru
      _
    %p137 = scmp.le.s32.totalorder 1, %s9
    %p138 = scmp.lt.s32.totalorder %s9, 3
    %p139 = pnand %p137, %p138
    %p140 = pneg %p139
    // Predicated region
    $region29: #{conv_block.3} parent=5 // pred_check
      _
    $region30: #{conv_block.3} parent=5 // pred_check_branch
      %142 = sbr.rel (%p139) target = $region32
    $region31: #{conv_block.3} parent=5 // pred_region
      %s143 = ssub.s32 %s9, 1
      %s144 = smul.u32 32, %s14
      %p145 = scmp.lt.s32.totalorder %s144, 63
      %s146 = scalar_select %p145, %s144, 63
      %s147 = smul.addr %s146, 8
      %s148 = scalar_lea.vmem %s0, %s147
      %p149 = pneg %p35
      %p150 = pneg %p32
      %p151 = pneg %p56
      %p152 = pneg %p53
      %p153 = pneg %p77
      %p154 = pneg %p74
      %p155 = pneg %p103
      %p156 = pneg %p100
      %s157 = smul.u32 32, %s14
      %p158 = scmp.lt.s32.totalorder %s157, 63
      %s159 = scalar_select %p158, %s157, 63
      %s160 = smul.addr %s159, 8
      %s161 = scalar_lea.vmem %s3, %s160
      %s162 = smul.u32 32, %s14
      %p163 = scmp.lt.s32.totalorder %s162, 63
      %s164 = scalar_select %p163, %s162, 63
      %s165 = smul.addr %s164, 8
      %s166 = scalar_lea.vmem %s0, %s165
      %s167 = smul.u32 32, %s14
      %s168 = smul.u32 32, %s14
      %p169 = scmp.lt.s32.totalorder %s168, 63
      %s170 = scalar_select %p169, %s168, 63
      %s171 = smul.addr %s170, 8
      %s172 = scalar_lea.vmem %s3, %s171
      %s173 = smul.u32 32, %s14
      %v174 = vld [vmem:[%s166] sm:$0xff]
      %v175 = vld [vmem:[%s166 + $0x8] sm:$0xff]
      %v176 = vld [vmem:[%s166 + $0x10] sm:$0xff]
      %v177 = vld [vmem:[%s166 + $0x18] sm:$0xff]
      %v178 = vld [vmem:[%s166 + $0x20] sm:$0xff]
      %v179 = vld [vmem:[%s166 + $0x28] sm:$0xff]
      %v180 = vld [vmem:[%s166 + $0x30] sm:$0xff]
      %v181 = vld [vmem:[%s166 + $0x38] sm:$0xff]
      %v182 = vld [vmem:[%s166 + $0x40] sm:$0xff]
      %v183 = vld [vmem:[%s166 + $0x48] sm:$0xff]
      %v184 = vld [vmem:[%s166 + $0x50] sm:$0xff]
      %v185 = vld [vmem:[%s166 + $0x58] sm:$0xff]
      %v186 = vld [vmem:[%s166 + $0x60] sm:$0xff]
      %v187 = vld [vmem:[%s166 + $0x68] sm:$0xff]
      %v188 = vld [vmem:[%s166 + $0x70] sm:$0xff]
      %v189 = vld [vmem:[%s166 + $0x78] sm:$0xff]
      %v190 = vld [vmem:[%s166 + $0x80] sm:$0xff]
      %v191 = vld [vmem:[%s166 + $0x88] sm:$0xff]
      %v192 = vld [vmem:[%s166 + $0x90] sm:$0xff]
      %v193 = vld [vmem:[%s166 + $0x98] sm:$0xff]
      %v194 = vld [vmem:[%s166 + $0xa0] sm:$0xff]
      %v195 = vld [vmem:[%s166 + $0xa8] sm:$0xff]
      %v196 = vld [vmem:[%s166 + $0xb0] sm:$0xff]
      %v197 = vld [vmem:[%s166 + $0xb8] sm:$0xff]
      %v198 = vld [vmem:[%s166 + $0xc0] sm:$0xff]
      %v199 = vld [vmem:[%s166 + $0xc8] sm:$0xff]
      %v200 = vld [vmem:[%s166 + $0xd0] sm:$0xff]
      %v201 = vld [vmem:[%s166 + $0xd8] sm:$0xff]
      %v202 = vld [vmem:[%s166 + $0xe0] sm:$0xff]
      %v203 = vld [vmem:[%s166 + $0xe8] sm:$0xff]
      %v204 = vld [vmem:[%s166 + $0xf0] sm:$0xff]
      %v205 = vld [vmem:[%s166 + $0xf8] sm:$0xff]
      %v206 = vld [vmem:[%s1] sm:$0x1]
      %v208 = vperm.slane %v206, 0
      %v210 = vmul.f32 %v174, %v208
      %v211 = vmul.f32 %v175, %v208
      %v212 = vmul.f32 %v176, %v208
      %v213 = vmul.f32 %v177, %v208
      %v214 = vmul.f32 %v178, %v208
      %v215 = vmul.f32 %v179, %v208
      %v216 = vmul.f32 %v180, %v208
      %v217 = vmul.f32 %v181, %v208
      %v218 = vmul.f32 %v182, %v208
      %v219 = vmul.f32 %v183, %v208
      %v220 = vmul.f32 %v184, %v208
      %v221 = vmul.f32 %v185, %v208
      %v222 = vmul.f32 %v186, %v208
      %v223 = vmul.f32 %v187, %v208
      %v224 = vmul.f32 %v188, %v208
      %v225 = vmul.f32 %v189, %v208
      %v226 = vmul.f32 %v190, %v208
      %v227 = vmul.f32 %v191, %v208
      %v228 = vmul.f32 %v192, %v208
      %v229 = vmul.f32 %v193, %v208
      %v230 = vmul.f32 %v194, %v208
      %v231 = vmul.f32 %v195, %v208
      %v232 = vmul.f32 %v196, %v208
      %v233 = vmul.f32 %v197, %v208
      %v234 = vmul.f32 %v198, %v208
      %v235 = vmul.f32 %v199, %v208
      %v236 = vmul.f32 %v200, %v208
      %v237 = vmul.f32 %v201, %v208
      %v238 = vmul.f32 %v202, %v208
      %v239 = vmul.f32 %v203, %v208
      %v240 = vmul.f32 %v204, %v208
      %v241 = vmul.f32 %v205, %v208
      %v242 = vld [vmem:[%s2] sm:$0x1]
      %v244 = vperm.slane %v242, 0
      %v246 = vadd.f32 %v210, %v244
      %v247 = vadd.f32 %v211, %v244
      %v248 = vadd.f32 %v212, %v244
      %v249 = vadd.f32 %v213, %v244
      %v250 = vadd.f32 %v214, %v244
      %v251 = vadd.f32 %v215, %v244
      %v252 = vadd.f32 %v216, %v244
      %v253 = vadd.f32 %v217, %v244
      %v254 = vadd.f32 %v218, %v244
      %v255 = vadd.f32 %v219, %v244
      %v256 = vadd.f32 %v220, %v244
      %v257 = vadd.f32 %v221, %v244
      %v258 = vadd.f32 %v222, %v244
      %v259 = vadd.f32 %v223, %v244
      %v260 = vadd.f32 %v224, %v244
      %v261 = vadd.f32 %v225, %v244
      %v262 = vadd.f32 %v226, %v244
      %v263 = vadd.f32 %v227, %v244
      %v264 = vadd.f32 %v228, %v244
      %v265 = vadd.f32 %v229, %v244
      %v266 = vadd.f32 %v230, %v244
      %v267 = vadd.f32 %v231, %v244
      %v268 = vadd.f32 %v232, %v244
      %v269 = vadd.f32 %v233, %v244
      %v270 = vadd.f32 %v234, %v244
      %v271 = vadd.f32 %v235, %v244
      %v272 = vadd.f32 %v236, %v244
      %v273 = vadd.f32 %v237, %v244
      %v274 = vadd.f32 %v238, %v244
      %v275 = vadd.f32 %v239, %v244
      %v276 = vadd.f32 %v240, %v244
      %v277 = vadd.f32 %v241, %v244
      %v278 = vmax.f32 %v246, 0.0
      %v279 = vmax.f32 %v247, 0.0
      %v280 = vmax.f32 %v248, 0.0
      %v281 = vmax.f32 %v249, 0.0
      %v282 = vmax.f32 %v250, 0.0
      %v283 = vmax.f32 %v251, 0.0
      %v284 = vmax.f32 %v252, 0.0
      %v285 = vmax.f32 %v253, 0.0
      %v286 = vmax.f32 %v254, 0.0
      %v287 = vmax.f32 %v255, 0.0
      %v288 = vmax.f32 %v256, 0.0
      %v289 = vmax.f32 %v257, 0.0
      %v290 = vmax.f32 %v258, 0.0
      %v291 = vmax.f32 %v259, 0.0
      %v292 = vmax.f32 %v260, 0.0
      %v293 = vmax.f32 %v261, 0.0
      %v294 = vmax.f32 %v262, 0.0
      %v295 = vmax.f32 %v263, 0.0
      %v296 = vmax.f32 %v264, 0.0
      %v297 = vmax.f32 %v265, 0.0
      %v298 = vmax.f32 %v266, 0.0
      %v299 = vmax.f32 %v267, 0.0
      %v300 = vmax.f32 %v268, 0.0
      %v301 = vmax.f32 %v269, 0.0
      %v302 = vmax.f32 %v270, 0.0
      %v303 = vmax.f32 %v271, 0.0
      %v304 = vmax.f32 %v272, 0.0
      %v305 = vmax.f32 %v273, 0.0
      %v306 = vmax.f32 %v274, 0.0
      %v307 = vmax.f32 %v275, 0.0
      %v308 = vmax.f32 %v276, 0.0
      %v309 = vmax.f32 %v277, 0.0
      %310 = vst [vmem:[%s172] sm:$0xff] %v278
      %311 = vst [vmem:[%s172 + $0x8] sm:$0xff] %v279
      %312 = vst [vmem:[%s172 + $0x10] sm:$0xff] %v280
      %313 = vst [vmem:[%s172 + $0x18] sm:$0xff] %v281
      %314 = vst [vmem:[%s172 + $0x20] sm:$0xff] %v282
      %315 = vst [vmem:[%s172 + $0x28] sm:$0xff] %v283
      %316 = vst [vmem:[%s172 + $0x30] sm:$0xff] %v284
      %317 = vst [vmem:[%s172 + $0x38] sm:$0xff] %v285
      %318 = vst [vmem:[%s172 + $0x40] sm:$0xff] %v286
      %319 = vst [vmem:[%s172 + $0x48] sm:$0xff] %v287
      %320 = vst [vmem:[%s172 + $0x50] sm:$0xff] %v288
      %321 = vst [vmem:[%s172 + $0x58] sm:$0xff] %v289
      %322 = vst [vmem:[%s172 + $0x60] sm:$0xff] %v290
      %323 = vst [vmem:[%s172 + $0x68] sm:$0xff] %v291
      %324 = vst [vmem:[%s172 + $0x70] sm:$0xff] %v292
      %325 = vst [vmem:[%s172 + $0x78] sm:$0xff] %v293
      %326 = vst [vmem:[%s172 + $0x80] sm:$0xff] %v294
      %327 = vst [vmem:[%s172 + $0x88] sm:$0xff] %v295
      %328 = vst [vmem:[%s172 + $0x90] sm:$0xff] %v296
      %329 = vst [vmem:[%s172 + $0x98] sm:$0xff] %v297
      %330 = vst [vmem:[%s172 + $0xa0] sm:$0xff] %v298
      %331 = vst [vmem:[%s172 + $0xa8] sm:$0xff] %v299
      %332 = vst [vmem:[%s172 + $0xb0] sm:$0xff] %v300
      %333 = vst [vmem:[%s172 + $0xb8] sm:$0xff] %v301
      %334 = vst [vmem:[%s172 + $0xc0] sm:$0xff] %v302
      %335 = vst [vmem:[%s172 + $0xc8] sm:$0xff] %v303
      %336 = vst [vmem:[%s172 + $0xd0] sm:$0xff] %v304
      %337 = vst [vmem:[%s172 + $0xd8] sm:$0xff] %v305
      %338 = vst [vmem:[%s172 + $0xe0] sm:$0xff] %v306
      %339 = vst [vmem:[%s172 + $0xe8] sm:$0xff] %v307
      %340 = vst [vmem:[%s172 + $0xf0] sm:$0xff] %v308
      %341 = vst [vmem:[%s172 + $0xf8] sm:$0xff] %v309
      %s342 = smul.u32 32, %s14
      %p343 = scmp.lt.s32.totalorder %s342, 63
      %s344 = scalar_select %p343, %s342, 63
      %s345 = smul.addr %s344, 8
      %s346 = scalar_lea.vmem %s3, %s345
      // Predicated region
      $region33: #{conv_block.3} parent=31 // pred_check
        %p347 = pneg %p100
      $region34: #{conv_block.3} parent=31 // pred_check_branch
        %349 = sbr.rel (%p347) target = $region36
      $region35: #{conv_block.3} parent=31 // pred_region
        %s350 = smul.u32 32, %s14
      $region36: #{conv_block.3} parent=31 // pred_fallthru
        _
    $region32: #{conv_block.3} parent=5 // pred_fallthru
      _
    %p351 = scmp.le.s32.totalorder 2, %s9
    // Predicated region
    $region37: #{conv_block.3} parent=5 // pred_check
      %p352 = pneg %p351
    $region38: #{conv_block.3} parent=5 // pred_check_branch
      %354 = sbr.rel (%p352) target = $region40
    $region39: #{conv_block.3} parent=5 // pred_region
      %s355 = ssub.s32 %s9, 2
      // Predicated region
      $region41: #{conv_block.3} parent=39 // pred_check
        %p356 = pneg %p106
      $region42: #{conv_block.3} parent=39 // pred_check_branch
        %358 = sbr.rel (%p356) target = $region44
      $region43: #{conv_block.3} parent=39 // pred_region
        %s359 = smul.u32 32, %s15
        %p360 = scmp.lt.s32.totalorder %s359, 63
        %s361 = scalar_select %p360, %s359, 63
        %s362 = smul.addr %s361, 8
        %s363 = scalar_lea.vmem %s3, %s362
      $region44: #{conv_block.3} parent=39 // pred_fallthru
        _
    $region40: #{conv_block.3} parent=5 // pred_fallthru
      _
  $region6: #{conv_block.3} parent=0 // loop_footer
    %s13 = sadd.s32 1, %s9
  $region7: #{conv_block.3} parent=0 // loop_footer_branch
    %8 = sbr.rel target = $region3
  $region8: #{conv_block.3} parent=0 // loop_exit
    _

// kernel: conv_block.2
$region0: #{conv_block.2}
  #allocation0 [shape = 'u32[]', space=smem, size = 0x4, offset = 0x4, fixed_abs, tag = 'smem constant byte address 0x4 - core index']
  #allocation1 [shape = 'u32[72,128]{1,0:T(1,128)}', space=vmem, size = 0x9000, scoped, tag = 'internal scratch']
  %s0 = inlined_call_operand.vmem [shape: bf16[512,128], index: 0, kind: input, shape index: {}]
  %s1 = inlined_call_operand.vmem [shape: bf16[128,128], index: 1, kind: input, shape index: {}]
  %s2 = inlined_call_operand.vmem [shape: f32[512,128], index: 2, kind: output, shape index: {0}]
  %s3 = inlined_call_operand.vmem [shape: f32[16,128], index: 3, kind: output, shape index: {1}]
  %4 = xla_tuple %s2, %s3
  %s5 = sld [smem:[#allocation0]]
  $region49: #{conv_block.2} parent=0
    _
  %s7 = ssub.s32 1, %s5
  %s8 = scalar_select 0, %s7, %s5
  loop: start=0, step=1, limit=4
  $region2: #{conv_block.2} parent=0 // loop_pre_header
    _
  $region3: #{conv_block.2} parent=0 // loop_header
    %s10 = sphi 0, %s14
    %p11 = scmp.ge.s32.totalorder %s10, 4
    %s20 = sphi 0, %s22
    %s23 = sphi 0, %s20
    %s24 = sphi 0, %s23
    %s40 = sphi 0, %s24
    %s44 = sphi 0, %s44
    %s46 = sphi 0, %s44
    %s47 = sphi 0, %s46
    %s61 = sphi 0, %s47
    %s67 = sphi 0, %s69
    %s70 = sphi 0, %s67
    %s71 = sphi 0, %s70
    %s87 = sphi 0, %s71
    %s93 = sphi 0, %s95
    %s96 = sphi 0, %s93
    %s97 = sphi 0, %s96
    %s113 = sphi 0, %s97
  $region4: #{conv_block.2} parent=0 // loop_header_branch
    %13 = sbr.rel (%p11) target = $region8
  $region5: #{conv_block.2} parent=0 // loop_body
    %s15 = ssub.s32 %s10, 1
    %s16 = ssub.s32 %s10, 2
    %s17 = sadd.s32 %s10, 1
    %s18 = ssub.s32 %s10, %s17
    %p19 = scmp.eq.s32.totalorder %s18, 0
    %s21 = sadd.s32 %s20, 1
    %s22 = scalar_select %p19, %s20, %s21
    %p25 = pneg %p19
    %p26 = scmp.eq.s32.totalorder %s10, 1
    %p27 = por %p25, %p26
    %p28 = scmp.ne.s32.totalorder %s20, %s23
    %p29 = scmp.eq.s32.totalorder %s10, 0
    %p30 = por %p28, %p29
    %p31 = scmp.ne.s32.totalorder %s20, %s23
    %p32 = scmp.eq.s32.totalorder %s15, 1
    %p33 = por %p31, %p32
    %p34 = scmp.ne.s32.totalorder %s23, %s24
    %p35 = scmp.eq.s32.totalorder %s15, 0
    %p36 = por %p34, %p35
    %p37 = scmp.ne.s32.totalorder %s23, %s24
    %p38 = scmp.eq.s32.totalorder %s16, 1
    %p39 = por %p37, %p38
    %p41 = scmp.ne.s32.totalorder %s24, %s40
    %p42 = scmp.eq.s32.totalorder %s16, 0
    %p43 = por %p41, %p42
    %s45 = sadd.s32 %s44, 1
    %p48 = scmp.eq.s32.totalorder %s10, 1
    %p49 = scmp.ne.s32.totalorder %s44, %s46
    %p50 = scmp.eq.s32.totalorder %s10, 0
    %p51 = por %p49, %p50
    %p52 = scmp.ne.s32.totalorder %s44, %s46
    %p53 = scmp.eq.s32.totalorder %s15, 1
    %p54 = por %p52, %p53
    %p55 = scmp.ne.s32.totalorder %s46, %s47
    %p56 = scmp.eq.s32.totalorder %s15, 0
    %p57 = por %p55, %p56
    %p58 = scmp.ne.s32.totalorder %s46, %s47
    %p59 = scmp.eq.s32.totalorder %s16, 1
    %p60 = por %p58, %p59
    %p62 = scmp.ne.s32.totalorder %s47, %s61
    %p63 = scmp.eq.s32.totalorder %s16, 0
    %p64 = por %p62, %p63
    %s65 = ssub.s32 %s10, %s17
    %p66 = scmp.eq.s32.totalorder %s65, 0
    %s68 = sadd.s32 %s67, 1
    %s69 = scalar_select %p66, %s67, %s68
    %p72 = pneg %p66
    %p73 = scmp.eq.s32.totalorder %s10, 1
    %p74 = por %p72, %p73
    %p75 = scmp.ne.s32.totalorder %s67, %s70
    %p76 = scmp.eq.s32.totalorder %s10, 0
    %p77 = por %p75, %p76
    %p78 = scmp.ne.s32.totalorder %s67, %s70
    %p79 = scmp.eq.s32.totalorder %s15, 1
    %p80 = por %p78, %p79
    %p81 = scmp.ne.s32.totalorder %s70, %s71
    %p82 = scmp.eq.s32.totalorder %s15, 0
    %p83 = por %p81, %p82
    %p84 = scmp.ne.s32.totalorder %s70, %s71
    %p85 = scmp.eq.s32.totalorder %s16, 1
    %p86 = por %p84, %p85
    %p88 = scmp.ne.s32.totalorder %s71, %s87
    %p89 = scmp.eq.s32.totalorder %s16, 0
    %p90 = por %p88, %p89
    %s91 = ssub.s32 %s10, %s17
    %p92 = scmp.eq.s32.totalorder %s91, 0
    %s94 = sadd.s32 %s93, 1
    %s95 = scalar_select %p92, %s93, %s94
    %p98 = pneg %p92
    %p99 = scmp.eq.s32.totalorder %s10, 1
    %p100 = por %p98, %p99
    %p101 = scmp.ne.s32.totalorder %s93, %s96
    %p102 = scmp.eq.s32.totalorder %s10, 0
    %p103 = por %p101, %p102
    %p104 = scmp.ne.s32.totalorder %s93, %s96
    %p105 = scmp.eq.s32.totalorder %s15, 1
    %p106 = por %p104, %p105
    %p107 = scmp.ne.s32.totalorder %s96, %s97
    %p108 = scmp.eq.s32.totalorder %s15, 0
    %p109 = por %p107, %p108
    %p110 = scmp.ne.s32.totalorder %s96, %s97
    %p111 = scmp.eq.s32.totalorder %s16, 1
    %p112 = por %p110, %p111
    %p114 = scmp.ne.s32.totalorder %s97, %s113
    %p115 = scmp.eq.s32.totalorder %s16, 0
    %p116 = por %p114, %p115
    %p117 = scmp.le.s32.totalorder 1, %s10
    %p118 = scmp.lt.s32.totalorder %s10, 3
    %p119 = pnand %p117, %p118
    %p120 = pneg %p119
    // Predicated region
    $region9: #{conv_block.2} parent=5 // pred_check
      _
    $region10: #{conv_block.2} parent=5 // pred_check_branch
      %122 = sbr.rel (%p119) target = $region12
    $region11: #{conv_block.2} parent=5 // pred_region
      %s123 = ssub.s32 %s10, 1
      // Predicated region
      $region13: #{conv_block.2} parent=11 // pred_check
        %p124 = pneg %p57
      $region14: #{conv_block.2} parent=11 // pred_check_branch
        %126 = sbr.rel (%p124) target = $region16
      $region15: #{conv_block.2} parent=11 // pred_region
        _
      $region16: #{conv_block.2} parent=11 // pred_fallthru
        _
    $region12: #{conv_block.2} parent=5 // pred_fallthru
      _
    %p127 = scmp.lt.s32.totalorder %s10, 2
    // Predicated region
    $region17: #{conv_block.2} parent=5 // pred_check
      %p128 = pneg %p127
    $region18: #{conv_block.2} parent=5 // pred_check_branch
      %130 = sbr.rel (%p128) target = $region20
    $region19: #{conv_block.2} parent=5 // pred_region
      // Predicated region
      $region21: #{conv_block.2} parent=19 // pred_check
        %p131 = pneg %p30
      $region22: #{conv_block.2} parent=19 // pred_check_branch
        %133 = sbr.rel (%p131) target = $region24
      $region23: #{conv_block.2} parent=19 // pred_region
        %s134 = smul.u32 32, %s10
        %p135 = scmp.lt.s32.totalorder %s134, 63
        %s136 = scalar_select %p135, %s134, 63
        %s137 = smul.addr %s136, 4
        %s138 = scalar_lea.vmem %s0, %s137
        %s139 = smul.u32 32, %s10
      $region24: #{conv_block.2} parent=19 // pred_fallthru
        _
    $region20: #{conv_block.2} parent=5 // pred_fallthru
      _
    %p140 = scmp.le.s32.totalorder 1, %s10
    %p141 = scmp.lt.s32.totalorder %s10, 3
    %p142 = pnand %p140, %p141
    %p143 = pneg %p142
    // Predicated region
    $region25: #{conv_block.2} parent=5 // pred_check
      _
    $region26: #{conv_block.2} parent=5 // pred_check_branch
      %145 = sbr.rel (%p142) target = $region28
    $region27: #{conv_block.2} parent=5 // pred_region
      %s146 = ssub.s32 %s10, 1
      %s147 = smul.u32 32, %s15
      %p148 = scmp.lt.s32.totalorder %s147, 63
      %s149 = scalar_select %p148, %s147, 63
      %s150 = smul.addr %s149, 4
      %s151 = scalar_lea.vmem %s0, %s150
      %p152 = pneg %p36
      %p153 = pneg %p33
      %p154 = pneg %p57
      %p155 = pneg %p54
      %p156 = pneg %p83
      %p157 = pneg %p80
      %s158 = smul.u32 32, %s15
      %p159 = scmp.lt.s32.totalorder %s158, 63
      %s160 = scalar_select %p159, %s158, 63
      %s161 = smul.addr %s160, 8
      %s162 = scalar_lea.vmem %s2, %s161
      %p163 = pneg %p109
      %p164 = pneg %p106
      %p165 = scmp.lt.s32.totalorder %s15, 1
      %s166 = scalar_select %p165, %s15, 1
      %s167 = smul.addr %s166, 8
      %s168 = scalar_lea.vmem %s3, %s167
      %s169 = smul.u32 32, %s15
      %p170 = scmp.lt.s32.totalorder %s169, 63
      %s171 = scalar_select %p170, %s169, 63
      %s172 = smul.addr %s171, 4
      %s173 = scalar_lea.vmem %s0, %s172
      %s174 = smul.u32 32, %s15
      %s175 = smul.u32 32, %s15
      %p176 = scmp.lt.s32.totalorder %s175, 63
      %s177 = scalar_select %p176, %s175, 63
      %s178 = smul.addr %s177, 8
      %s179 = scalar_lea.vmem %s2, %s178
      %s180 = smul.u32 32, %s15
      %p181 = scmp.lt.s32.totalorder %s15, 1
      %s182 = scalar_select %p181, %s15, 1
      %s183 = smul.addr %s182, 8
      %s184 = scalar_lea.vmem %s3, %s183
      %v185 = vld [vmem:[%s173] sm:$0xf]
      %v186 = vld [vmem:[%s173 + $0x4] sm:$0xf]
      %v187 = vld [vmem:[%s173 + $0x8] sm:$0xf]
      %v188 = vld [vmem:[%s173 + $0xc] sm:$0xf]
      %v189 = vld [vmem:[%s173 + $0x10] sm:$0xf]
      %v190 = vld [vmem:[%s173 + $0x14] sm:$0xf]
      %v191 = vld [vmem:[%s173 + $0x18] sm:$0xf]
      %v192 = vld [vmem:[%s173 + $0x1c] sm:$0xf]
      %v193 = vld [vmem:[%s173 + $0x20] sm:$0xf]
      %v194 = vld [vmem:[%s173 + $0x24] sm:$0xf]
      %v195 = vld [vmem:[%s173 + $0x28] sm:$0xf]
      %v196 = vld [vmem:[%s173 + $0x2c] sm:$0xf]
      %v197 = vld [vmem:[%s173 + $0x30] sm:$0xf]
      %v198 = vld [vmem:[%s173 + $0x34] sm:$0xf]
      %v199 = vld [vmem:[%s173 + $0x38] sm:$0xf]
      %v200 = vld [vmem:[%s173 + $0x3c] sm:$0xf]
      %v201 = vld [vmem:[%s173 + $0x40] sm:$0xf]
      %v202 = vld [vmem:[%s173 + $0x44] sm:$0xf]
      %v203 = vld [vmem:[%s173 + $0x48] sm:$0xf]
      %v204 = vld [vmem:[%s173 + $0x4c] sm:$0xf]
      %v205 = vld [vmem:[%s173 + $0x50] sm:$0xf]
      %v206 = vld [vmem:[%s173 + $0x54] sm:$0xf]
      %v207 = vld [vmem:[%s173 + $0x58] sm:$0xf]
      %v208 = vld [vmem:[%s173 + $0x5c] sm:$0xf]
      %v209 = vld [vmem:[%s173 + $0x60] sm:$0xf]
      %v210 = vld [vmem:[%s173 + $0x64] sm:$0xf]
      %v211 = vld [vmem:[%s173 + $0x68] sm:$0xf]
      %v212 = vld [vmem:[%s173 + $0x6c] sm:$0xf]
      %v213 = vld [vmem:[%s173 + $0x70] sm:$0xf]
      %v214 = vld [vmem:[%s173 + $0x74] sm:$0xf]
      %v215 = vld [vmem:[%s173 + $0x78] sm:$0xf]
      %v216 = vld [vmem:[%s173 + $0x7c] sm:$0xf]
      %v217 = vld [vmem:[%s1] sm:$0xf]
      %v218 = vld [vmem:[%s1 + $0x4] sm:$0xf]
      %v219 = vld [vmem:[%s1 + $0x8] sm:$0xf]
      %v220 = vld [vmem:[%s1 + $0xc] sm:$0xf]
      %v221 = vld [vmem:[%s1 + $0x10] sm:$0xf]
      %v222 = vld [vmem:[%s1 + $0x14] sm:$0xf]
      %v223 = vld [vmem:[%s1 + $0x18] sm:$0xf]
      %v224 = vld [vmem:[%s1 + $0x1c] sm:$0xf]
      %v225 = vld [vmem:[%s1 + $0x20] sm:$0xf]
      %v226 = vld [vmem:[%s1 + $0x24] sm:$0xf]
      %v227 = vld [vmem:[%s1 + $0x28] sm:$0xf]
      %v228 = vld [vmem:[%s1 + $0x2c] sm:$0xf]
      %v229 = vld [vmem:[%s1 + $0x30] sm:$0xf]
      %v230 = vld [vmem:[%s1 + $0x34] sm:$0xf]
      %v231 = vld [vmem:[%s1 + $0x38] sm:$0xf]
      %v232 = vld [vmem:[%s1 + $0x3c] sm:$0xf]
      %v265 = vunpack.c.l.b16 %v185
      %v266 = vunpack.c.l.b16 %v186
      %v267 = vunpack.c.l.b16 %v187
      %v268 = vunpack.c.l.b16 %v188
      %v269 = vunpack.c.l.b16 %v189
      %v270 = vunpack.c.l.b16 %v190
      %v271 = vunpack.c.l.b16 %v191
      %v272 = vunpack.c.l.b16 %v192
      %v273 = vunpack.c.l.b16 %v193
      %v274 = vunpack.c.l.b16 %v194
      %v275 = vunpack.c.l.b16 %v195
      %v276 = vunpack.c.l.b16 %v196
      %v277 = vunpack.c.l.b16 %v197
      %v278 = vunpack.c.l.b16 %v198
      %v279 = vunpack.c.l.b16 %v199
      %v280 = vunpack.c.l.b16 %v200
      %v281 = vunpack.c.l.b16 %v201
      %v282 = vunpack.c.l.b16 %v202
      %v283 = vunpack.c.l.b16 %v203
      %v284 = vunpack.c.l.b16 %v204
      %v285 = vunpack.c.l.b16 %v205
      %v286 = vunpack.c.l.b16 %v206
      %v287 = vunpack.c.l.b16 %v207
      %v288 = vunpack.c.l.b16 %v208
      %v289 = vunpack.c.l.b16 %v209
      %v290 = vunpack.c.l.b16 %v210
      %v291 = vunpack.c.l.b16 %v211
      %v292 = vunpack.c.l.b16 %v212
      %v293 = vunpack.c.l.b16 %v213
      %v294 = vunpack.c.l.b16 %v214
      %v295 = vunpack.c.l.b16 %v215
      %v296 = vunpack.c.l.b16 %v216
      %v297 = vpack.c.b16 %v266, %v265
      %v298 = vpack.c.b16 %v268, %v267
      %v299 = vpack.c.b16 %v270, %v269
      %v300 = vpack.c.b16 %v272, %v271
      %v301 = vpack.c.b16 %v274, %v273
      %v302 = vpack.c.b16 %v276, %v275
      %v303 = vpack.c.b16 %v278, %v277
      %v304 = vpack.c.b16 %v280, %v279
      %v305 = vpack.c.b16 %v282, %v281
      %v306 = vpack.c.b16 %v284, %v283
      %v307 = vpack.c.b16 %v286, %v285
      %v308 = vpack.c.b16 %v288, %v287
      %v309 = vpack.c.b16 %v290, %v289
      %v310 = vpack.c.b16 %v292, %v291
      %v311 = vpack.c.b16 %v294, %v293
      %v312 = vpack.c.b16 %v296, %v295
      %v345 = vunpack.c.l.b16 %v217
      %v346 = vunpack.c.l.b16 %v218
      %v347 = vunpack.c.l.b16 %v219
      %v348 = vunpack.c.l.b16 %v220
      %v349 = vunpack.c.l.b16 %v221
      %v350 = vunpack.c.l.b16 %v222
      %v351 = vunpack.c.l.b16 %v223
      %v352 = vunpack.c.l.b16 %v224
      %v353 = vunpack.c.l.b16 %v225
      %v354 = vunpack.c.l.b16 %v226
      %v355 = vunpack.c.l.b16 %v227
      %v356 = vunpack.c.l.b16 %v228
      %v357 = vunpack.c.l.b16 %v229
      %v358 = vunpack.c.l.b16 %v230
      %v359 = vunpack.c.l.b16 %v231
      %v360 = vunpack.c.l.b16 %v232
      %v361 = vpack.c.b16 %v346, %v345
      %v362 = vpack.c.b16 %v348, %v347
      %v363 = vpack.c.b16 %v350, %v349
      %v364 = vpack.c.b16 %v352, %v351
      %v365 = vpack.c.b16 %v354, %v353
      %v366 = vpack.c.b16 %v356, %v355
      %v367 = vpack.c.b16 %v358, %v357
      %v368 = vpack.c.b16 %v360, %v359
      %377 = vmatpush.bf16.msra.mxu0 %v368
      %378 = vmatpush.bf16.msra.mxu0 %v367
      %379 = vmatpush.bf16.msra.mxu0 %v366
      %380 = vmatpush.bf16.msra.mxu0 %v365
      %381 = vmatpush.bf16.msra.mxu0 %v364
      %382 = vmatpush.bf16.msra.mxu0 %v363
      %383 = vmatpush.bf16.msra.mxu0 %v362
      %384 = vmatpush.bf16.msra.mxu0 %v361
      %385 = vmatmul.bf16.gmra.mxu0 %v297
      %v386 = vpop.f32.mrf.mxu0
      %v387 = vadd.f32 0.0, %v386
      %v388 = vpop.f32.mrf.mxu0
      %v389 = vadd.f32 0.0, %v388
      %390 = vmatmul.bf16.gmra.mxu0 %v298
      %v391 = vpop.f32.mrf.mxu0
      %v392 = vadd.f32 0.0, %v391
      %v393 = vpop.f32.mrf.mxu0
      %v394 = vadd.f32 0.0, %v393
      %395 = vmatmul.bf16.gmra.mxu0 %v299
      %v396 = vpop.f32.mrf.mxu0
      %v397 = vadd.f32 0.0, %v396
      %v398 = vpop.f32.mrf.mxu0
      %v399 = vadd.f32 0.0, %v398
      %400 = vmatmul.bf16.gmra.mxu0 %v300
      %v401 = vpop.f32.mrf.mxu0
      %v402 = vadd.f32 0.0, %v401
      %v403 = vpop.f32.mrf.mxu0
      %v404 = vadd.f32 0.0, %v403
      %405 = vmatmul.bf16.gmra.mxu0 %v301
      %v406 = vpop.f32.mrf.mxu0
      %v407 = vadd.f32 0.0, %v406
      %v408 = vpop.f32.mrf.mxu0
      %v409 = vadd.f32 0.0, %v408
      %410 = vmatmul.bf16.gmra.mxu0 %v302
      %v411 = vpop.f32.mrf.mxu0
      %v412 = vadd.f32 0.0, %v411
      %v413 = vpop.f32.mrf.mxu0
      %v414 = vadd.f32 0.0, %v413
      %415 = vmatmul.bf16.gmra.mxu0 %v303
      %v416 = vpop.f32.mrf.mxu0
      %v417 = vadd.f32 0.0, %v416
      %v418 = vpop.f32.mrf.mxu0
      %v419 = vadd.f32 0.0, %v418
      %420 = vmatmul.bf16.gmra.mxu0 %v304
      %v421 = vpop.f32.mrf.mxu0
      %v422 = vadd.f32 0.0, %v421
      %v423 = vpop.f32.mrf.mxu0
      %v424 = vadd.f32 0.0, %v423
      %425 = vmatmul.bf16.gmra.mxu0 %v305
      %v426 = vpop.f32.mrf.mxu0
      %v427 = vadd.f32 0.0, %v426
      %v428 = vpop.f32.mrf.mxu0
      %v429 = vadd.f32 0.0, %v428
      %430 = vmatmul.bf16.gmra.mxu0 %v306
      %v431 = vpop.f32.mrf.mxu0
      %v432 = vadd.f32 0.0, %v431
      %v433 = vpop.f32.mrf.mxu0
      %v434 = vadd.f32 0.0, %v433
      %435 = vmatmul.bf16.gmra.mxu0 %v307
      %v436 = vpop.f32.mrf.mxu0
      %v437 = vadd.f32 0.0, %v436
      %v438 = vpop.f32.mrf.mxu0
      %v439 = vadd.f32 0.0, %v438
      %440 = vmatmul.bf16.gmra.mxu0 %v308
      %v441 = vpop.f32.mrf.mxu0
      %v442 = vadd.f32 0.0, %v441
      %v443 = vpop.f32.mrf.mxu0
      %v444 = vadd.f32 0.0, %v443
      %445 = vmatmul.bf16.gmra.mxu0 %v309
      %v446 = vpop.f32.mrf.mxu0
      %v447 = vadd.f32 0.0, %v446
      %v448 = vpop.f32.mrf.mxu0
      %v449 = vadd.f32 0.0, %v448
      %450 = vmatmul.bf16.gmra.mxu0 %v310
      %v451 = vpop.f32.mrf.mxu0
      %v452 = vadd.f32 0.0, %v451
      %v453 = vpop.f32.mrf.mxu0
      %v454 = vadd.f32 0.0, %v453
      %455 = vmatmul.bf16.gmra.mxu0 %v311
      %v456 = vpop.f32.mrf.mxu0
      %v457 = vadd.f32 0.0, %v456
      %v458 = vpop.f32.mrf.mxu0
      %v459 = vadd.f32 0.0, %v458
      %460 = vmatmul.bf16.gmra.mxu0 %v312
      %v461 = vpop.f32.mrf.mxu0
      %v462 = vadd.f32 0.0, %v461
      %v463 = vpop.f32.mrf.mxu0
      %v464 = vadd.f32 0.0, %v463
      %465 = vdwg.mxu0
      %466 = vst [vmem:[%s179] sm:$0xff] %v387
      %467 = vst [vmem:[%s179 + $0x8] sm:$0xff] %v389
      %468 = vst [vmem:[%s179 + $0x10] sm:$0xff] %v392
      %469 = vst [vmem:[%s179 + $0x18] sm:$0xff] %v394
      %470 = vst [vmem:[%s179 + $0x20] sm:$0xff] %v397
      %471 = vst [vmem:[%s179 + $0x28] sm:$0xff] %v399
      %472 = vst [vmem:[%s179 + $0x30] sm:$0xff] %v402
      %473 = vst [vmem:[%s179 + $0x38] sm:$0xff] %v404
      %474 = vst [vmem:[%s179 + $0x40] sm:$0xff] %v407
      %475 = vst [vmem:[%s179 + $0x48] sm:$0xff] %v409
      %476 = vst [vmem:[%s179 + $0x50] sm:$0xff] %v412
      %477 = vst [vmem:[%s179 + $0x58] sm:$0xff] %v414
      %478 = vst [vmem:[%s179 + $0x60] sm:$0xff] %v417
      %479 = vst [vmem:[%s179 + $0x68] sm:$0xff] %v419
      %480 = vst [vmem:[%s179 + $0x70] sm:$0xff] %v422
      %481 = vst [vmem:[%s179 + $0x78] sm:$0xff] %v424
      %482 = vst [vmem:[%s179 + $0x80] sm:$0xff] %v427
      %483 = vst [vmem:[%s179 + $0x88] sm:$0xff] %v429
      %484 = vst [vmem:[%s179 + $0x90] sm:$0xff] %v432
      %485 = vst [vmem:[%s179 + $0x98] sm:$0xff] %v434
      %486 = vst [vmem:[%s179 + $0xa0] sm:$0xff] %v437
      %487 = vst [vmem:[%s179 + $0xa8] sm:$0xff] %v439
      %488 = vst [vmem:[%s179 + $0xb0] sm:$0xff] %v442
      %489 = vst [vmem:[%s179 + $0xb8] sm:$0xff] %v444
      %490 = vst [vmem:[%s179 + $0xc0] sm:$0xff] %v447
      %491 = vst [vmem:[%s179 + $0xc8] sm:$0xff] %v449
      %492 = vst [vmem:[%s179 + $0xd0] sm:$0xff] %v452
      %493 = vst [vmem:[%s179 + $0xd8] sm:$0xff] %v454
      %494 = vst [vmem:[%s179 + $0xe0] sm:$0xff] %v457
      %495 = vst [vmem:[%s179 + $0xe8] sm:$0xff] %v459
      %496 = vst [vmem:[%s179 + $0xf0] sm:$0xff] %v462
      %497 = vst [vmem:[%s179 + $0xf8] sm:$0xff] %v464
      %v498 = vadd.f32 %v387, %v389
      %v499 = vadd.f32 %v498, %v392
      %v500 = vadd.f32 %v499, %v394
      %v501 = vadd.f32 %v500, %v397
      %v502 = vadd.f32 %v501, %v399
      %v503 = vadd.f32 %v502, %v402
      %v504 = vadd.f32 %v503, %v404
      %v505 = vadd.f32 %v504, %v407
      %v506 = vadd.f32 %v505, %v409
      %v507 = vadd.f32 %v506, %v412
      %v508 = vadd.f32 %v507, %v414
      %v509 = vadd.f32 %v508, %v417
      %v510 = vadd.f32 %v509, %v419
      %v511 = vadd.f32 %v510, %v422
      %v512 = vadd.f32 %v511, %v424
      %v513 = vadd.f32 %v512, %v427
      %v514 = vadd.f32 %v513, %v429
      %v515 = vadd.f32 %v514, %v432
      %v516 = vadd.f32 %v515, %v434
      %v517 = vadd.f32 %v516, %v437
      %v518 = vadd.f32 %v517, %v439
      %v519 = vadd.f32 %v518, %v442
      %v520 = vadd.f32 %v519, %v444
      %v521 = vadd.f32 %v520, %v447
      %v522 = vadd.f32 %v521, %v449
      %v523 = vadd.f32 %v522, %v452
      %v524 = vadd.f32 %v523, %v454
      %v525 = vadd.f32 %v524, %v457
      %v526 = vadd.f32 %v525, %v459
      %v527 = vadd.f32 %v526, %v462
      %v528 = vadd.f32 %v527, %v464
      %v529 = vrot.slane %v528, 4
      %v530 = vadd.f32 %v528, %v529
      %v531 = vrot.slane %v530, 2
      %v532 = vadd.f32 %v530, %v531
      %v533 = vrot.slane %v532, 1
      %v534 = vadd.f32 %v532, %v533
      %v535 = vmul.f32 %v387, %v387
      %v536 = vmul.f32 %v389, %v389
      %v537 = vmul.f32 %v392, %v392
      %v538 = vmul.f32 %v394, %v394
      %v539 = vmul.f32 %v397, %v397
      %v540 = vmul.f32 %v399, %v399
      %v541 = vmul.f32 %v402, %v402
      %v542 = vmul.f32 %v404, %v404
      %v543 = vmul.f32 %v407, %v407
      %v544 = vmul.f32 %v409, %v409
      %v545 = vmul.f32 %v412, %v412
      %v546 = vmul.f32 %v414, %v414
      %v547 = vmul.f32 %v417, %v417
      %v548 = vmul.f32 %v419, %v419
      %v549 = vmul.f32 %v422, %v422
      %v550 = vmul.f32 %v424, %v424
      %v551 = vmul.f32 %v427, %v427
      %v552 = vmul.f32 %v429, %v429
      %v553 = vmul.f32 %v432, %v432
      %v554 = vmul.f32 %v434, %v434
      %v555 = vmul.f32 %v437, %v437
      %v556 = vmul.f32 %v439, %v439
      %v557 = vmul.f32 %v442, %v442
      %v558 = vmul.f32 %v444, %v444
      %v559 = vmul.f32 %v447, %v447
      %v560 = vmul.f32 %v449, %v449
      %v561 = vmul.f32 %v452, %v452
      %v562 = vmul.f32 %v454, %v454
      %v563 = vmul.f32 %v457, %v457
      %v564 = vmul.f32 %v459, %v459
      %v565 = vmul.f32 %v462, %v462
      %v566 = vmul.f32 %v464, %v464
      %v567 = vadd.f32 %v535, %v536
      %v568 = vadd.f32 %v567, %v537
      %v569 = vadd.f32 %v568, %v538
      %v570 = vadd.f32 %v569, %v539
      %v571 = vadd.f32 %v570, %v540
      %v572 = vadd.f32 %v571, %v541
      %v573 = vadd.f32 %v572, %v542
      %v574 = vadd.f32 %v573, %v543
      %v575 = vadd.f32 %v574, %v544
      %v576 = vadd.f32 %v575, %v545
      %v577 = vadd.f32 %v576, %v546
      %v578 = vadd.f32 %v577, %v547
      %v579 = vadd.f32 %v578, %v548
      %v580 = vadd.f32 %v579, %v549
      %v581 = vadd.f32 %v580, %v550
      %v582 = vadd.f32 %v581, %v551
      %v583 = vadd.f32 %v582, %v552
      %v584 = vadd.f32 %v583, %v553
      %v585 = vadd.f32 %v584, %v554
      %v586 = vadd.f32 %v585, %v555
      %v587 = vadd.f32 %v586, %v556
      %v588 = vadd.f32 %v587, %v557
      %v589 = vadd.f32 %v588, %v558
      %v590 = vadd.f32 %v589, %v559
      %v591 = vadd.f32 %v590, %v560
      %v592 = vadd.f32 %v591, %v561
      %v593 = vadd.f32 %v592, %v562
      %v594 = vadd.f32 %v593, %v563
      %v595 = vadd.f32 %v594, %v564
      %v596 = vadd.f32 %v595, %v565
      %v597 = vadd.f32 %v596, %v566
      %v598 = vrot.slane %v597, 4
      %v599 = vadd.f32 %v597, %v598
      %v600 = vrot.slane %v599, 2
      %v601 = vadd.f32 %v599, %v600
      %v602 = vrot.slane %v601, 1
      %v603 = vadd.f32 %v601, %v602
      %vm604 = vcmask 1040384
      %v605 = vsel %vm604, %v534, %v603
      %vm606 = vcmask 1041408
      %v607 = vsel %vm606, %v605, 0.0
      %608 = vst [vmem:[%s184] sm:$0xff] %v607
      %s609 = smul.u32 32, %s15
      %p610 = scmp.lt.s32.totalorder %s609, 63
      %s611 = scalar_select %p610, %s609, 63
      %s612 = smul.addr %s611, 8
      %s613 = scalar_lea.vmem %s2, %s612
      %p614 = scmp.lt.s32.totalorder %s15, 1
      %s615 = scalar_select %p614, %s15, 1
      %s616 = smul.addr %s615, 8
      %s617 = scalar_lea.vmem %s3, %s616
      // Predicated region
      $region29: #{conv_block.2} parent=27 // pred_check
        %p618 = pneg %p80
      $region30: #{conv_block.2} parent=27 // pred_check_branch
        %620 = sbr.rel (%p618) target = $region32
      $region31: #{conv_block.2} parent=27 // pred_region
        %s621 = smul.u32 32, %s15
      $region32: #{conv_block.2} parent=27 // pred_fallthru
        _
      // Predicated region
      $region33: #{conv_block.2} parent=27 // pred_check
        %p622 = pneg %p106
      $region34: #{conv_block.2} parent=27 // pred_check_branch
        %624 = sbr.rel (%p622) target = $region36
      $region35: #{conv_block.2} parent=27 // pred_region
        _
      $region36: #{conv_block.2} parent=27 // pred_fallthru
        _
    $region28: #{conv_block.2} parent=5 // pred_fallthru
      _
    %p625 = scmp.le.s32.totalorder 2, %s10
    // Predicated region
    $region37: #{conv_block.2} parent=5 // pred_check
      %p626 = pneg %p625
    $region38: #{conv_block.2} parent=5 // pred_check_branch
      %628 = sbr.rel (%p626) target = $region40
    $region39: #{conv_block.2} parent=5 // pred_region
      %s629 = ssub.s32 %s10, 2
      // Predicated region
      $region41: #{conv_block.2} parent=39 // pred_check
        %p630 = pneg %p86
      $region42: #{conv_block.2} parent=39 // pred_check_branch
        %632 = sbr.rel (%p630) target = $region44
      $region43: #{conv_block.2} parent=39 // pred_region
        %s633 = smul.u32 32, %s16
        %p634 = scmp.lt.s32.totalorder %s633, 63
        %s635 = scalar_select %p634, %s633, 63
        %s636 = smul.addr %s635, 8
        %s637 = scalar_lea.vmem %s2, %s636
      $region44: #{conv_block.2} parent=39 // pred_fallthru
        _
      // Predicated region
      $region45: #{conv_block.2} parent=39 // pred_check
        %p638 = pneg %p112
      $region46: #{conv_block.2} parent=39 // pred_check_branch
        %640 = sbr.rel (%p638) target = $region48
      $region47: #{conv_block.2} parent=39 // pred_region
        %p641 = scmp.lt.s32.totalorder %s16, 1
        %s642 = scalar_select %p641, %s16, 1
        %s643 = smul.addr %s642, 8
        %s644 = scalar_lea.vmem %s3, %s643
      $region48: #{conv_block.2} parent=39 // pred_fallthru
        _
    $region40: #{conv_block.2} parent=5 // pred_fallthru
      _
  $region6: #{conv_block.2} parent=0 // loop_footer
    %s14 = sadd.s32 1, %s10
  $region7: #{conv_block.2} parent=0 // loop_footer_branch
    %9 = sbr.rel target = $region3
  $region8: #{conv_block.2} parent=0 // loop_exit
    _

</llo_original>
